<compile_context>
chip_gen: v5e
topology: v5e:2x2
jax: 0.10.0
libtpu: 0.0.40
codegen_flags: <defaults>
</compile_context>

<pallas_src>
import functools

import jax
import jax.numpy as jnp
import numpy as np
from jax.experimental import pallas as pl
from jax.experimental.pallas import tpu as pltpu


def _group_reduce(x, op, k, h):
    """Reduce across the k h-wide lane groups of the last axis.

    Result is broadcast back into every group slot (each h-wide block holds
    the full group reduction), using XLU lane rotations instead of masked
    sub-vreg slices.  Log-depth when k is a power of two.
    """
    if k & (k - 1) == 0:
        span = 1
        while span < k:
            x = op(x, pltpu.roll(x, shift=span * h, axis=1))
            span *= 2
        return x
    acc = x
    for j in range(1, k):
        acc = op(acc, pltpu.roll(x, shift=j * h, axis=1))
    return acc


def gmsr_kernel(x_ref, h0_ref, cs_ref, w_ref, b_ref, fcw_ref, fcb_ref,
                fcw2_ref, fcb2_ref, out_ref, preh_ref, *, k, h, batch, chunk):
    kh = k * h
    s = pl.program_id(0)

    # Initial hidden state: tanh(concat(hidden_states)) -- first chunk only.
    @pl.when(s == 0)
    def _():
        preh_ref[...] = jnp.tanh(h0_ref[...])

    # ---- batched input embedding for this chunk (hoisted out of the loop) --
    # fcw2_ref/fcb2_ref are FC_W2*0.125 / FC_B2*0.125 tiled k times along
    # lanes, so `emb` is (chunk*batch, k*h) with every h-wide group block
    # equal to inputs_emb[i]/8.
    e = jnp.maximum(
        jnp.dot(x_ref[...], fcw_ref[...], preferred_element_type=jnp.float32)
        + fcb_ref[...], 0.0)
    emb = (jnp.dot(e, fcw2_ref[...], preferred_element_type=jnp.float32)
           + fcb2_ref[...])

    cos_sin = cs_ref[...]            # (1, k*h) f32
    w_bf16 = w_ref[...]              # (k*h, k*h) bf16
    bias = b_ref[...]                # (1, k*h) f32

    # Lane mask selecting the newest group slot (last h lanes).  Hoisted.
    lane = jax.lax.broadcasted_iota(jnp.int32, (batch, kh), 1)
    newest = lane >= (k - 1) * h

    preH = preh_ref[...]             # (batch, k*h) f32 recurrent carry
    out_buf = jnp.zeros((batch, kh), jnp.float32)

    for i in range(chunk):           # short static unroll (chunk is small)
        preH = preH * cos_sin
        att = jnp.dot(preH.astype(jnp.bfloat16), w_bf16,
                      preferred_element_type=jnp.float32) + bias

        # softmax over the k groups, full-128-lane via XLU rolls
        a = jnp.abs(att) * 0.5
        m = _group_reduce(a, jnp.maximum, k, h)
        p = jnp.exp(a - m)
        denom = _group_reduce(p, jnp.add, k, h)
        num = _group_reduce(preH * p, jnp.add, k, h)

        # num/denom and emb are group-broadcast, so h_full holds this step's
        # h_output replicated in every group block.
        h_full = jnp.tanh(emb[i * batch:(i + 1) * batch, :] + num / denom)

        # shift: drop oldest group, append new output (roll + lane select)
        preH = jnp.where(newest, h_full,
                         pltpu.roll(preH, shift=(k - 1) * h, axis=1))

        # lane-dense output: collect k consecutive outputs, store 128 lanes
        out_buf = jnp.where(newest, h_full,
                            pltpu.roll(out_buf, shift=(k - 1) * h, axis=1))
        if (i + 1) % k == 0:
            c = i // k
            out_ref[:, c * kh:(c + 1) * kh] = out_buf

    preh_ref[...] = preH


def gmsr_forward(inputs, hidden_states, params, *, k, h, chunk=None):
    """Wrapper: parameter preprocessing + pallas_call + output reshaping."""
    W, B, R, FC_W, FC_B, FC_W2, FC_B2 = params
    seq, batch, in_size = inputs.shape
    assert in_size == h, "GMSRModel requires input_size == h"
    if chunk is None:
        chunk = k
        for cand in range(k, min(seq, 8 * k) + 1, k):
            if seq % cand == 0:
                chunk = cand
    assert chunk % k == 0 and seq % chunk == 0 and seq >= k
    kh = k * h

    # One-time parameter preprocessing (pure JAX):
    cosR = jnp.cos(R).reshape(1, k, h // 2)
    sinR = jnp.sin(R).reshape(1, k, h // 2)
    cos_sin = jnp.concatenate([cosR, sinR], axis=-1).reshape(1, kh)
    w_bf16 = W.astype(jnp.bfloat16)              # bf16 MXU operand
    fcw2_t = jnp.tile(FC_W2 * 0.125, (1, k))     # fold /8, tile over groups
    fcb2_t = jnp.tile(FC_B2 * 0.125, (1, k))

    x_flat = inputs.reshape(seq * batch, in_size)
    h0 = jnp.concatenate(list(hidden_states), axis=-1)   # (batch, k*h)

    def full(shape):
        return pl.BlockSpec(shape, lambda s: (0,) * len(shape))

    grid_spec = pltpu.PrefetchScalarGridSpec(
        num_scalar_prefetch=0,
        grid=(seq // chunk,),
        in_specs=[
            pl.BlockSpec((chunk * batch, in_size), lambda s: (s, 0)),  # inputs
            full((batch, kh)),       # h0
            full((1, kh)),           # cos_sin
            full((kh, kh)),          # W (bf16)
            full((1, kh)),           # B
            full((in_size, h)),      # FC_W
            full((1, h)),            # FC_B
            full((in_size, kh)),     # FC_W2/8, group-tiled
            full((1, kh)),           # FC_B2/8, group-tiled
        ],
        out_specs=pl.BlockSpec((batch, chunk * h), lambda s: (0, s)),
        scratch_shapes=[pltpu.VMEM((batch, kh), jnp.float32)],  # preH carry
    )

    out_flat = pl.pallas_call(
        functools.partial(gmsr_kernel, k=k, h=h, batch=batch, chunk=chunk),
        out_shape=jax.ShapeDtypeStruct((batch, seq * h), jnp.float32),
        grid_spec=grid_spec,
        compiler_params=pltpu.CompilerParams(
            dimension_semantics=("arbitrary",)),   # sequential recurrence
    )(x_flat, h0, cos_sin, w_bf16, B, FC_W, FC_B, fcw2_t, fcb2_t)

    h_return = out_flat.reshape(batch, seq, h).transpose(1, 0, 2)  # (S, B, H)
    H = h_return[-k:]                                              # (k, B, H)
    return h_return, H


def gmsr_reference(inputs, hidden_states, params, *, k, h):
    """Pure-JAX f32 reference mirroring the PyTorch forward literally."""
    W, B, R, FC_W, FC_B, FC_W2, FC_B2 = params
    seq, batch, _ = inputs.shape
    emb = jnp.maximum(inputs @ FC_W + FC_B, 0.0) @ FC_W2 + FC_B2
    preH = jnp.tanh(jnp.concatenate(list(hidden_states), axis=-1))
    cosR = jnp.cos(R).reshape(1, k, -1)
    sinR = jnp.sin(R).reshape(1, k, -1)
    cos_sin = jnp.concatenate([cosR, sinR], axis=-1).reshape(1, -1)
    outs = []
    for i in range(seq):
        preH = preH * cos_sin
        att = preH @ W + B
        p3 = preH.reshape(batch, k, h)
        a3 = att.reshape(batch, k, h)
        attn = jax.nn.softmax(jnp.abs(a3 / 2.0), axis=1)
        pin = (p3 * attn).sum(axis=1)
        h_out = jnp.tanh(emb[i] / 8.0 + pin)
        outs.append(h_out)
        preH = jnp.concatenate([p3[:, 1:, :].reshape(batch, -1), h_out], axis=-1)
    return jnp.stack(outs), jnp.stack(outs[-k:])


if __name__ == "__main__":
    # small shapes consistent with the module (input_size must equal h)
    k, h, input_size = 4, 32, 32
    seq, batch = 8, 2

    key = jax.random.PRNGKey(0)
    keys = jax.random.split(key, 9)

    W = jax.random.normal(keys[0], (k * h, k * h), jnp.float32)
    B = jax.random.normal(keys[1], (1, k * h), jnp.float32)
    R = jax.random.normal(keys[2], (1, k * h // 2), jnp.float32)
    FC_W = jax.random.normal(keys[3], (input_size, h), jnp.float32)
    FC_B = jax.random.normal(keys[4], (1, h), jnp.float32)
    FC_W2 = jax.random.normal(keys[5], (input_size, h), jnp.float32)
    FC_B2 = jax.random.normal(keys[6], (1, h), jnp.float32)
    params = (W, B, R, FC_W, FC_B, FC_W2, FC_B2)

    inputs = jax.random.normal(keys[7], (seq, batch, input_size), jnp.float32)
    hidden_states = [
        jax.random.normal(jax.random.fold_in(keys[8], i), (batch, h), jnp.float32)
        for i in range(k)
    ]

    # chunk=4 -> grid=(2,): exercises the carried-state seq pipeline.
    h_return, H = gmsr_forward(inputs, hidden_states, params, k=k, h=h, chunk=4)
    jax.block_until_ready((h_return, H))

    # Correctness vs pure-f32 reference.  Tolerance loosened from 5e-3 because
    # the recurrent 128x128 matmul intentionally runs with bf16 MXU operands
    # (f32 accumulation), per the performance review.
    h_ref, H_ref = gmsr_reference(inputs, hidden_states, params, k=k, h=h)
    np.testing.assert_allclose(np.asarray(h_return), np.asarray(h_ref),
                               rtol=5e-2, atol=5e-2)
    np.testing.assert_allclose(np.asarray(H), np.asarray(H_ref),
                               rtol=5e-2, atol=5e-2)
    assert h_return.shape == (seq, batch, h)
    assert H.shape == (k, batch, h)

    print("KERNEL_OK")
</pallas_src>

<mosaic_0001>
module attributes {stable_mosaic.version = 11 : i64} {
  func.func @gmsr_kernel(%arg0: i32, %arg1: memref<8x32xf32, #tpu.memory_space<vmem>>, %arg2: memref<2x128xf32, #tpu.memory_space<vmem>>, %arg3: memref<1x128xf32, #tpu.memory_space<vmem>>, %arg4: memref<128x128xbf16, #tpu.memory_space<vmem>>, %arg5: memref<1x128xf32, #tpu.memory_space<vmem>>, %arg6: memref<32x32xf32, #tpu.memory_space<vmem>>, %arg7: memref<1x32xf32, #tpu.memory_space<vmem>>, %arg8: memref<32x128xf32, #tpu.memory_space<vmem>>, %arg9: memref<1x128xf32, #tpu.memory_space<vmem>>, %arg10: memref<2x128xf32, #tpu.memory_space<vmem>>, %arg11: memref<2x128xf32, #tpu.memory_space<vmem>>) attributes {dimension_semantics = [#tpu.dimension_semantics<arbitrary>], iteration_bounds = array<i64: 2>, scalar_prefetch = 0 : i64, scratch_operands = 1 : i64, tpu.core_type = #tpu.core_type<tc>, window_params = [{transform_indices = @transform_0, window_bounds = array<i64: 8, 32>}, {pipeline_mode = #tpu.pipeline_mode<synchronous>, transform_indices = @transform_1, window_bounds = array<i64: 2, 128>}, {pipeline_mode = #tpu.pipeline_mode<synchronous>, transform_indices = @transform_2, window_bounds = array<i64: 1, 128>}, {pipeline_mode = #tpu.pipeline_mode<synchronous>, transform_indices = @transform_3, window_bounds = array<i64: 128, 128>}, {pipeline_mode = #tpu.pipeline_mode<synchronous>, transform_indices = @transform_4, window_bounds = array<i64: 1, 128>}, {pipeline_mode = #tpu.pipeline_mode<synchronous>, transform_indices = @transform_5, window_bounds = array<i64: 32, 32>}, {pipeline_mode = #tpu.pipeline_mode<synchronous>, transform_indices = @transform_6, window_bounds = array<i64: 1, 32>}, {pipeline_mode = #tpu.pipeline_mode<synchronous>, transform_indices = @transform_7, window_bounds = array<i64: 32, 128>}, {pipeline_mode = #tpu.pipeline_mode<synchronous>, transform_indices = @transform_8, window_bounds = array<i64: 1, 128>}, {transform_indices = @transform_9, window_bounds = array<i64: 2, 128>}]} {
    %c0_i32 = arith.constant 0 : i32
    %0 = arith.cmpi eq, %arg0, %c0_i32 : i32
    %1 = arith.extui %0 : i1 to i32
    %c0_i32_0 = arith.constant 0 : i32
    %2 = arith.cmpi ne, %1, %c0_i32_0 : i32
    scf.if %2 {
      %c0_63 = arith.constant 0 : index
      %c0_64 = arith.constant 0 : index
      %154 = vector.load %arg2[%c0_63, %c0_64] : memref<2x128xf32, #tpu.memory_space<vmem>>, vector<2x128xf32>
      %155 = math.tanh %154 : vector<2x128xf32>
      %c0_65 = arith.constant 0 : index
      %c0_66 = arith.constant 0 : index
      %156 = vector.load %arg11[%c0_65, %c0_66] : memref<2x128xf32, #tpu.memory_space<vmem>>, vector<2x128xf32>
      tpu.vector_store %arg11[%c0_65, %c0_66], %155 {strides = array<i32>} : memref<2x128xf32, #tpu.memory_space<vmem>>, vector<2x128xf32>,
    } else {
    }
    %c0 = arith.constant 0 : index
    %c0_1 = arith.constant 0 : index
    %3 = vector.load %arg1[%c0, %c0_1] : memref<8x32xf32, #tpu.memory_space<vmem>>, vector<8x32xf32>
    %c0_2 = arith.constant 0 : index
    %c0_3 = arith.constant 0 : index
    %4 = vector.load %arg6[%c0_2, %c0_3] : memref<32x32xf32, #tpu.memory_space<vmem>>, vector<32x32xf32>
    %cst = arith.constant dense<0.000000e+00> : vector<8x32xf32>
    %5 = tpu.matmul %3, %4, %cst {dimension_numbers = #tpu.dot_dimension_numbers<[1], [0], [0], [1], [0, 0, 1, 1], [], []>} : vector<8x32xf32>, vector<32x32xf32>, vector<8x32xf32> -> vector<8x32xf32>
    %c0_4 = arith.constant 0 : index
    %c0_5 = arith.constant 0 : index
    %6 = vector.load %arg7[%c0_4, %c0_5] : memref<1x32xf32, #tpu.memory_space<vmem>>, vector<1x32xf32>
    %7 = vector.broadcast %6 : vector<1x32xf32> to vector<8x32xf32>
    %8 = arith.addf %5, %7 : vector<8x32xf32>
    %cst_6 = arith.constant 0.000000e+00 : f32
    %9 = vector.broadcast %cst_6 : f32 to vector<8x32xf32>
    %10 = arith.maximumf %8, %9 : vector<8x32xf32>
    %c0_7 = arith.constant 0 : index
    %c0_8 = arith.constant 0 : index
    %11 = vector.load %arg8[%c0_7, %c0_8] : memref<32x128xf32, #tpu.memory_space<vmem>>, vector<32x128xf32>
    %cst_9 = arith.constant dense<0.000000e+00> : vector<8x128xf32>
    %12 = tpu.matmul %10, %11, %cst_9 {dimension_numbers = #tpu.dot_dimension_numbers<[1], [0], [0], [1], [0, 0, 1, 1], [], []>} : vector<8x32xf32>, vector<32x128xf32>, vector<8x128xf32> -> vector<8x128xf32>
    %c0_10 = arith.constant 0 : index
    %c0_11 = arith.constant 0 : index
    %13 = vector.load %arg9[%c0_10, %c0_11] : memref<1x128xf32, #tpu.memory_space<vmem>>, vector<1x128xf32>
    %14 = vector.broadcast %13 : vector<1x128xf32> to vector<8x128xf32>
    %15 = arith.addf %12, %14 : vector<8x128xf32>
    %c0_12 = arith.constant 0 : index
    %c0_13 = arith.constant 0 : index
    %16 = vector.load %arg3[%c0_12, %c0_13] : memref<1x128xf32, #tpu.memory_space<vmem>>, vector<1x128xf32>
    %c0_14 = arith.constant 0 : index
    %c0_15 = arith.constant 0 : index
    %17 = vector.load %arg4[%c0_14, %c0_15] : memref<128x128xbf16, #tpu.memory_space<vmem>>, vector<128x128xbf16>
    %c0_16 = arith.constant 0 : index
    %c0_17 = arith.constant 0 : index
    %18 = vector.load %arg5[%c0_16, %c0_17] : memref<1x128xf32, #tpu.memory_space<vmem>>, vector<1x128xf32>
    %19 = tpu.iota {dimensions = array<i32: 1>} : vector<2x128xi32>
    %c96_i32 = arith.constant 96 : i32
    %20 = vector.broadcast %c96_i32 : i32 to vector<2x128xi32>
    %21 = arith.cmpi sge, %19, %20 : vector<2x128xi32>
    %c0_18 = arith.constant 0 : index
    %c0_19 = arith.constant 0 : index
    %22 = vector.load %arg11[%c0_18, %c0_19] : memref<2x128xf32, #tpu.memory_space<vmem>>, vector<2x128xf32>
    %cst_20 = arith.constant 0.000000e+00 : f32
    %23 = vector.broadcast %cst_20 : f32 to vector<2x128xf32>
    %24 = vector.broadcast %16 : vector<1x128xf32> to vector<2x128xf32>
    %25 = arith.mulf %22, %24 : vector<2x128xf32>
    %26 = arith.truncf %25 : vector<2x128xf32> to vector<2x128xbf16>
    %cst_21 = arith.constant dense<0.000000e+00> : vector<2x128xf32>
    %27 = tpu.matmul %26, %17, %cst_21 {dimension_numbers = #tpu.dot_dimension_numbers<[1], [0], [0], [1], [0, 0, 1, 1], [], []>} : vector<2x128xbf16>, vector<128x128xbf16>, vector<2x128xf32> -> vector<2x128xf32>
    %28 = vector.broadcast %18 : vector<1x128xf32> to vector<2x128xf32>
    %29 = arith.addf %27, %28 : vector<2x128xf32>
    %30 = math.absf %29 : vector<2x128xf32>
    %cst_22 = arith.constant 5.000000e-01 : f32
    %31 = vector.broadcast %cst_22 : f32 to vector<2x128xf32>
    %32 = arith.mulf %30, %31 : vector<2x128xf32>
    %c32_i32 = arith.constant 32 : i32
    %33 = tpu.dynamic_rotate %32 by %c32_i32 dim 1 : vector<2x128xf32>, i32 -> vector<2x128xf32>
    %34 = arith.maximumf %32, %33 : vector<2x128xf32>
    %c64_i32 = arith.constant 64 : i32
    %35 = tpu.dynamic_rotate %34 by %c64_i32 dim 1 : vector<2x128xf32>, i32 -> vector<2x128xf32>
    %36 = arith.maximumf %34, %35 : vector<2x128xf32>
    %37 = arith.subf %32, %36 : vector<2x128xf32>
    %38 = math.exp %37 : vector<2x128xf32>
    %c32_i32_23 = arith.constant 32 : i32
    %39 = tpu.dynamic_rotate %38 by %c32_i32_23 dim 1 : vector<2x128xf32>, i32 -> vector<2x128xf32>
    %40 = arith.addf %38, %39 : vector<2x128xf32>
    %c64_i32_24 = arith.constant 64 : i32
    %41 = tpu.dynamic_rotate %40 by %c64_i32_24 dim 1 : vector<2x128xf32>, i32 -> vector<2x128xf32>
    %42 = arith.addf %40, %41 : vector<2x128xf32>
    %43 = arith.mulf %25, %38 : vector<2x128xf32>
    %c32_i32_25 = arith.constant 32 : i32
    %44 = tpu.dynamic_rotate %43 by %c32_i32_25 dim 1 : vector<2x128xf32>, i32 -> vector<2x128xf32>
    %45 = arith.addf %43, %44 : vector<2x128xf32>
    %c64_i32_26 = arith.constant 64 : i32
    %46 = tpu.dynamic_rotate %45 by %c64_i32_26 dim 1 : vector<2x128xf32>, i32 -> vector<2x128xf32>
    %47 = arith.addf %45, %46 : vector<2x128xf32>
    %48 = vector.extract_strided_slice %15 {offsets = [0, 0], sizes = [2, 128], strides = [1, 1]} : vector<8x128xf32> to vector<2x128xf32>
    %49 = arith.divf %47, %42 : vector<2x128xf32>
    %50 = arith.addf %48, %49 : vector<2x128xf32>
    %51 = math.tanh %50 : vector<2x128xf32>
    %c96_i32_27 = arith.constant 96 : i32
    %52 = tpu.dynamic_rotate %25 by %c96_i32_27 dim 1 : vector<2x128xf32>, i32 -> vector<2x128xf32>
    %53 = arith.select %21, %51, %52 : vector<2x128xi1>, vector<2x128xf32>
    %c96_i32_28 = arith.constant 96 : i32
    %54 = tpu.dynamic_rotate %23 by %c96_i32_28 dim 1 : vector<2x128xf32>, i32 -> vector<2x128xf32>
    %55 = arith.select %21, %51, %54 : vector<2x128xi1>, vector<2x128xf32>
    %56 = vector.broadcast %16 : vector<1x128xf32> to vector<2x128xf32>
    %57 = arith.mulf %53, %56 : vector<2x128xf32>
    %58 = arith.truncf %57 : vector<2x128xf32> to vector<2x128xbf16>
    %cst_29 = arith.constant dense<0.000000e+00> : vector<2x128xf32>
    %59 = tpu.matmul %58, %17, %cst_29 {dimension_numbers = #tpu.dot_dimension_numbers<[1], [0], [0], [1], [0, 0, 1, 1], [], []>} : vector<2x128xbf16>, vector<128x128xbf16>, vector<2x128xf32> -> vector<2x128xf32>
    %60 = vector.broadcast %18 : vector<1x128xf32> to vector<2x128xf32>
    %61 = arith.addf %59, %60 : vector<2x128xf32>
    %62 = math.absf %61 : vector<2x128xf32>
    %cst_30 = arith.constant 5.000000e-01 : f32
    %63 = vector.broadcast %cst_30 : f32 to vector<2x128xf32>
    %64 = arith.mulf %62, %63 : vector<2x128xf32>
    %c32_i32_31 = arith.constant 32 : i32
    %65 = tpu.dynamic_rotate %64 by %c32_i32_31 dim 1 : vector<2x128xf32>, i32 -> vector<2x128xf32>
    %66 = arith.maximumf %64, %65 : vector<2x128xf32>
    %c64_i32_32 = arith.constant 64 : i32
    %67 = tpu.dynamic_rotate %66 by %c64_i32_32 dim 1 : vector<2x128xf32>, i32 -> vector<2x128xf32>
    %68 = arith.maximumf %66, %67 : vector<2x128xf32>
    %69 = arith.subf %64, %68 : vector<2x128xf32>
    %70 = math.exp %69 : vector<2x128xf32>
    %c32_i32_33 = arith.constant 32 : i32
    %71 = tpu.dynamic_rotate %70 by %c32_i32_33 dim 1 : vector<2x128xf32>, i32 -> vector<2x128xf32>
    %72 = arith.addf %70, %71 : vector<2x128xf32>
    %c64_i32_34 = arith.constant 64 : i32
    %73 = tpu.dynamic_rotate %72 by %c64_i32_34 dim 1 : vector<2x128xf32>, i32 -> vector<2x128xf32>
    %74 = arith.addf %72, %73 : vector<2x128xf32>
    %75 = arith.mulf %57, %70 : vector<2x128xf32>
    %c32_i32_35 = arith.constant 32 : i32
    %76 = tpu.dynamic_rotate %75 by %c32_i32_35 dim 1 : vector<2x128xf32>, i32 -> vector<2x128xf32>
    %77 = arith.addf %75, %76 : vector<2x128xf32>
    %c64_i32_36 = arith.constant 64 : i32
    %78 = tpu.dynamic_rotate %77 by %c64_i32_36 dim 1 : vector<2x128xf32>, i32 -> vector<2x128xf32>
    %79 = arith.addf %77, %78 : vector<2x128xf32>
    %80 = vector.extract_strided_slice %15 {offsets = [2, 0], sizes = [2, 128], strides = [1, 1]} : vector<8x128xf32> to vector<2x128xf32>
    %81 = arith.divf %79, %74 : vector<2x128xf32>
    %82 = arith.addf %80, %81 : vector<2x128xf32>
    %83 = math.tanh %82 : vector<2x128xf32>
    %c96_i32_37 = arith.constant 96 : i32
    %84 = tpu.dynamic_rotate %57 by %c96_i32_37 dim 1 : vector<2x128xf32>, i32 -> vector<2x128xf32>
    %85 = arith.select %21, %83, %84 : vector<2x128xi1>, vector<2x128xf32>
    %c96_i32_38 = arith.constant 96 : i32
    %86 = tpu.dynamic_rotate %55 by %c96_i32_38 dim 1 : vector<2x128xf32>, i32 -> vector<2x128xf32>
    %87 = arith.select %21, %83, %86 : vector<2x128xi1>, vector<2x128xf32>
    %88 = vector.broadcast %16 : vector<1x128xf32> to vector<2x128xf32>
    %89 = arith.mulf %85, %88 : vector<2x128xf32>
    %90 = arith.truncf %89 : vector<2x128xf32> to vector<2x128xbf16>
    %cst_39 = arith.constant dense<0.000000e+00> : vector<2x128xf32>
    %91 = tpu.matmul %90, %17, %cst_39 {dimension_numbers = #tpu.dot_dimension_numbers<[1], [0], [0], [1], [0, 0, 1, 1], [], []>} : vector<2x128xbf16>, vector<128x128xbf16>, vector<2x128xf32> -> vector<2x128xf32>
    %92 = vector.broadcast %18 : vector<1x128xf32> to vector<2x128xf32>
    %93 = arith.addf %91, %92 : vector<2x128xf32>
    %94 = math.absf %93 : vector<2x128xf32>
    %cst_40 = arith.constant 5.000000e-01 : f32
    %95 = vector.broadcast %cst_40 : f32 to vector<2x128xf32>
    %96 = arith.mulf %94, %95 : vector<2x128xf32>
    %c32_i32_41 = arith.constant 32 : i32
    %97 = tpu.dynamic_rotate %96 by %c32_i32_41 dim 1 : vector<2x128xf32>, i32 -> vector<2x128xf32>
    %98 = arith.maximumf %96, %97 : vector<2x128xf32>
    %c64_i32_42 = arith.constant 64 : i32
    %99 = tpu.dynamic_rotate %98 by %c64_i32_42 dim 1 : vector<2x128xf32>, i32 -> vector<2x128xf32>
    %100 = arith.maximumf %98, %99 : vector<2x128xf32>
    %101 = arith.subf %96, %100 : vector<2x128xf32>
    %102 = math.exp %101 : vector<2x128xf32>
    %c32_i32_43 = arith.constant 32 : i32
    %103 = tpu.dynamic_rotate %102 by %c32_i32_43 dim 1 : vector<2x128xf32>, i32 -> vector<2x128xf32>
    %104 = arith.addf %102, %103 : vector<2x128xf32>
    %c64_i32_44 = arith.constant 64 : i32
    %105 = tpu.dynamic_rotate %104 by %c64_i32_44 dim 1 : vector<2x128xf32>, i32 -> vector<2x128xf32>
    %106 = arith.addf %104, %105 : vector<2x128xf32>
    %107 = arith.mulf %89, %102 : vector<2x128xf32>
    %c32_i32_45 = arith.constant 32 : i32
    %108 = tpu.dynamic_rotate %107 by %c32_i32_45 dim 1 : vector<2x128xf32>, i32 -> vector<2x128xf32>
    %109 = arith.addf %107, %108 : vector<2x128xf32>
    %c64_i32_46 = arith.constant 64 : i32
    %110 = tpu.dynamic_rotate %109 by %c64_i32_46 dim 1 : vector<2x128xf32>, i32 -> vector<2x128xf32>
    %111 = arith.addf %109, %110 : vector<2x128xf32>
    %112 = vector.extract_strided_slice %15 {offsets = [4, 0], sizes = [2, 128], strides = [1, 1]} : vector<8x128xf32> to vector<2x128xf32>
    %113 = arith.divf %111, %106 : vector<2x128xf32>
    %114 = arith.addf %112, %113 : vector<2x128xf32>
    %115 = math.tanh %114 : vector<2x128xf32>
    %c96_i32_47 = arith.constant 96 : i32
    %116 = tpu.dynamic_rotate %89 by %c96_i32_47 dim 1 : vector<2x128xf32>, i32 -> vector<2x128xf32>
    %117 = arith.select %21, %115, %116 : vector<2x128xi1>, vector<2x128xf32>
    %c96_i32_48 = arith.constant 96 : i32
    %118 = tpu.dynamic_rotate %87 by %c96_i32_48 dim 1 : vector<2x128xf32>, i32 -> vector<2x128xf32>
    %119 = arith.select %21, %115, %118 : vector<2x128xi1>, vector<2x128xf32>
    %120 = vector.broadcast %16 : vector<1x128xf32> to vector<2x128xf32>
    %121 = arith.mulf %117, %120 : vector<2x128xf32>
    %122 = arith.truncf %121 : vector<2x128xf32> to vector<2x128xbf16>
    %cst_49 = arith.constant dense<0.000000e+00> : vector<2x128xf32>
    %123 = tpu.matmul %122, %17, %cst_49 {dimension_numbers = #tpu.dot_dimension_numbers<[1], [0], [0], [1], [0, 0, 1, 1], [], []>} : vector<2x128xbf16>, vector<128x128xbf16>, vector<2x128xf32> -> vector<2x128xf32>
    %124 = vector.broadcast %18 : vector<1x128xf32> to vector<2x128xf32>
    %125 = arith.addf %123, %124 : vector<2x128xf32>
    %126 = math.absf %125 : vector<2x128xf32>
    %cst_50 = arith.constant 5.000000e-01 : f32
    %127 = vector.broadcast %cst_50 : f32 to vector<2x128xf32>
    %128 = arith.mulf %126, %127 : vector<2x128xf32>
    %c32_i32_51 = arith.constant 32 : i32
    %129 = tpu.dynamic_rotate %128 by %c32_i32_51 dim 1 : vector<2x128xf32>, i32 -> vector<2x128xf32>
    %130 = arith.maximumf %128, %129 : vector<2x128xf32>
    %c64_i32_52 = arith.constant 64 : i32
    %131 = tpu.dynamic_rotate %130 by %c64_i32_52 dim 1 : vector<2x128xf32>, i32 -> vector<2x128xf32>
    %132 = arith.maximumf %130, %131 : vector<2x128xf32>
    %133 = arith.subf %128, %132 : vector<2x128xf32>
    %134 = math.exp %133 : vector<2x128xf32>
    %c32_i32_53 = arith.constant 32 : i32
    %135 = tpu.dynamic_rotate %134 by %c32_i32_53 dim 1 : vector<2x128xf32>, i32 -> vector<2x128xf32>
    %136 = arith.addf %134, %135 : vector<2x128xf32>
    %c64_i32_54 = arith.constant 64 : i32
    %137 = tpu.dynamic_rotate %136 by %c64_i32_54 dim 1 : vector<2x128xf32>, i32 -> vector<2x128xf32>
    %138 = arith.addf %136, %137 : vector<2x128xf32>
    %139 = arith.mulf %121, %134 : vector<2x128xf32>
    %c32_i32_55 = arith.constant 32 : i32
    %140 = tpu.dynamic_rotate %139 by %c32_i32_55 dim 1 : vector<2x128xf32>, i32 -> vector<2x128xf32>
    %141 = arith.addf %139, %140 : vector<2x128xf32>
    %c64_i32_56 = arith.constant 64 : i32
    %142 = tpu.dynamic_rotate %141 by %c64_i32_56 dim 1 : vector<2x128xf32>, i32 -> vector<2x128xf32>
    %143 = arith.addf %141, %142 : vector<2x128xf32>
    %144 = vector.extract_strided_slice %15 {offsets = [6, 0], sizes = [2, 128], strides = [1, 1]} : vector<8x128xf32> to vector<2x128xf32>
    %145 = arith.divf %143, %138 : vector<2x128xf32>
    %146 = arith.addf %144, %145 : vector<2x128xf32>
    %147 = math.tanh %146 : vector<2x128xf32>
    %c96_i32_57 = arith.constant 96 : i32
    %148 = tpu.dynamic_rotate %121 by %c96_i32_57 dim 1 : vector<2x128xf32>, i32 -> vector<2x128xf32>
    %149 = arith.select %21, %147, %148 : vector<2x128xi1>, vector<2x128xf32>
    %c96_i32_58 = arith.constant 96 : i32
    %150 = tpu.dynamic_rotate %119 by %c96_i32_58 dim 1 : vector<2x128xf32>, i32 -> vector<2x128xf32>
    %151 = arith.select %21, %147, %150 : vector<2x128xi1>, vector<2x128xf32>
    %c0_59 = arith.constant 0 : index
    %c0_60 = arith.constant 0 : index
    %152 = vector.load %arg10[%c0_59, %c0_60] : memref<2x128xf32, #tpu.memory_space<vmem>>, vector<2x128xf32>
    tpu.vector_store %arg10[%c0_59, %c0_60], %151 {strides = array<i32>} : memref<2x128xf32, #tpu.memory_space<vmem>>, vector<2x128xf32>,
    %c0_61 = arith.constant 0 : index
    %c0_62 = arith.constant 0 : index
    %153 = vector.load %arg11[%c0_61, %c0_62] : memref<2x128xf32, #tpu.memory_space<vmem>>, vector<2x128xf32>
    tpu.vector_store %arg11[%c0_61, %c0_62], %149 {strides = array<i32>} : memref<2x128xf32, #tpu.memory_space<vmem>>, vector<2x128xf32>,
    return
  }
  func.func @transform_0(%arg0: i32) -> (i32, i32) {
    %c0_i32 = arith.constant 0 : i32
    %c0_i32_0 = arith.constant 0 : i32
    return %arg0, %c0_i32 : i32, i32
  }
  func.func @transform_1(%arg0: i32) -> (i32, i32) {
    %c0_i32 = arith.constant 0 : i32
    %c0_i32_0 = arith.constant 0 : i32
    %c0_i32_1 = arith.constant 0 : i32
    return %c0_i32, %c0_i32_0 : i32, i32
  }
  func.func @transform_2(%arg0: i32) -> (i32, i32) {
    %c0_i32 = arith.constant 0 : i32
    %c0_i32_0 = arith.constant 0 : i32
    %c0_i32_1 = arith.constant 0 : i32
    return %c0_i32, %c0_i32_0 : i32, i32
  }
  func.func @transform_3(%arg0: i32) -> (i32, i32) {
    %c0_i32 = arith.constant 0 : i32
    %c0_i32_0 = arith.constant 0 : i32
    %c0_i32_1 = arith.constant 0 : i32
    return %c0_i32, %c0_i32_0 : i32, i32
  }
  func.func @transform_4(%arg0: i32) -> (i32, i32) {
    %c0_i32 = arith.constant 0 : i32
    %c0_i32_0 = arith.constant 0 : i32
    %c0_i32_1 = arith.constant 0 : i32
    return %c0_i32, %c0_i32_0 : i32, i32
  }
  func.func @transform_5(%arg0: i32) -> (i32, i32) {
    %c0_i32 = arith.constant 0 : i32
    %c0_i32_0 = arith.constant 0 : i32
    %c0_i32_1 = arith.constant 0 : i32
    return %c0_i32, %c0_i32_0 : i32, i32
  }
  func.func @transform_6(%arg0: i32) -> (i32, i32) {
    %c0_i32 = arith.constant 0 : i32
    %c0_i32_0 = arith.constant 0 : i32
    %c0_i32_1 = arith.constant 0 : i32
    return %c0_i32, %c0_i32_0 : i32, i32
  }
  func.func @transform_7(%arg0: i32) -> (i32, i32) {
    %c0_i32 = arith.constant 0 : i32
    %c0_i32_0 = arith.constant 0 : i32
    %c0_i32_1 = arith.constant 0 : i32
    return %c0_i32, %c0_i32_0 : i32, i32
  }
  func.func @transform_8(%arg0: i32) -> (i32, i32) {
    %c0_i32 = arith.constant 0 : i32
    %c0_i32_0 = arith.constant 0 : i32
    %c0_i32_1 = arith.constant 0 : i32
    return %c0_i32, %c0_i32_0 : i32, i32
  }
  func.func @transform_9(%arg0: i32) -> (i32, i32) {
    %c0_i32 = arith.constant 0 : i32
    %c0_i32_0 = arith.constant 0 : i32
    return %c0_i32, %arg0 : i32, i32
  }
}

</mosaic_0001>

<llo_original>
// kernel: tpu_custom_call.1
$region0: #{tpu_custom_call.1}
  #allocation0 [shape = 'u32[]', space=smem, size = 0x4, offset = 0x4, fixed_abs, tag = 'smem constant byte address 0x4 - core index']
  #allocation1 [shape = 'u32[72,128]{1,0:T(1,128)}', space=vmem, size = 0x9000, scoped, tag = 'internal scratch']
  #allocation2 [shape = 'f32[2,128]{1,0:T(2,128)}', space=vmem, size = 0x400, scoped, tag = 'scratch operand']
  %s0 = inlined_call_operand.hbm [shape: f32[16,32], index: 0, kind: input, shape index: {}]
  %s1 = inlined_call_operand.hbm [shape: f32[2,128], index: 1, kind: input, shape index: {}]
  %s2 = inlined_call_operand.vmem [shape: f32[1,128], index: 2, kind: input, shape index: {}]
  %s3 = inlined_call_operand.hbm [shape: bf16[128,128], index: 3, kind: input, shape index: {}]
  %s4 = inlined_call_operand.vmem [shape: f32[1,128], index: 4, kind: input, shape index: {}]
  %s5 = inlined_call_operand.hbm [shape: f32[32,32], index: 5, kind: input, shape index: {}]
  %s6 = inlined_call_operand.vmem [shape: f32[1,32], index: 6, kind: input, shape index: {}]
  %s7 = inlined_call_operand.hbm [shape: f32[32,128], index: 7, kind: input, shape index: {}]
  %s8 = inlined_call_operand.vmem [shape: f32[1,128], index: 8, kind: input, shape index: {}]
  %s9 = inlined_call_operand.hbm [shape: f32[2,256], index: 9, kind: output, shape index: {}]
  %s10 = sld [smem:[#allocation0]]
  $region93: #{tpu_custom_call.1} parent=0
    _
  %s12 = ssub.s32 1, %s10
  %s13 = scalar_select 0, %s12, %s10
  $region1: #{tpu_custom_call.1} parent=0
    #allocation3 [shape = 'u8[8192]{0}', space=vmem, size = 0x2000, scoped, tag = 'input window, operand 0']
    #allocation4 [shape = 's32[2]{0}', space=sflag, size = 0x8, scoped, tag = 'scoped memory for tpu_custom_call.1']
    #allocation5 [shape = 's32[2]{0}', space=sflag, size = 0x8, scoped, tag = 'scoped memory for tpu_custom_call.1']
    #allocation6 [shape = 'u8[1024]{0}', space=vmem, size = 0x400, scoped, tag = 'input window, operand 1, single buffered']
    #allocation7 [shape = 's32[1]{0}', space=sflag, size = 0x4, scoped, tag = 'scoped memory for tpu_custom_call.1']
    #allocation8 [shape = 'u8[32768]{0}', space=vmem, size = 0x8000, scoped, tag = 'input window, operand 3, single buffered']
    #allocation9 [shape = 'u8[16384]{0}', space=vmem, size = 0x4000, scoped, tag = 'input window, operand 5, single buffered']
    #allocation10 [shape = 's32[1]{0}', space=sflag, size = 0x4, scoped, tag = 'scoped memory for tpu_custom_call.1']
    #allocation11 [shape = 'u8[16384]{0}', space=vmem, size = 0x4000, scoped, tag = 'input window, operand 7, single buffered']
    #allocation12 [shape = 'u8[2048]{0}', space=vmem, size = 0x800, scoped, tag = 'output window, operand 0']
    %14 = vsyncpa [#allocation4], 0
    %s15 = scalar_lea.sflag [#allocation4], 1
    %16 = vsyncpa %s15, 0
    %17 = vsyncpa [#allocation7], 0
    %18 = vsyncpa [#allocation10], 0
    %19 = vsyncpa [#allocation5], 0
    %s20 = scalar_lea.sflag [#allocation5], 1
    %21 = vsyncpa %s20, 0
    loop: start=0, step=1, limit=4
    $region2: #{tpu_custom_call.1} parent=1 // loop_pre_header
      _
    $region3: #{tpu_custom_call.1} parent=1 // loop_header
      %s23 = sphi 0, %s27
      %p24 = scmp.ge.s32.totalorder %s23, 4
      %s33 = sphi 0, %s35
      %s36 = sphi 0, %s33
      %s37 = sphi 0, %s36
      %s53 = sphi 0, %s37
      %s57 = sphi 0, %s57
      %s59 = sphi 0, %s57
      %s60 = sphi 0, %s59
      %s74 = sphi 0, %s60
      %s78 = sphi 0, %s78
      %s80 = sphi 0, %s78
      %s81 = sphi 0, %s80
      %s95 = sphi 0, %s81
      %s99 = sphi 0, %s99
      %s101 = sphi 0, %s99
      %s102 = sphi 0, %s101
      %s116 = sphi 0, %s102
      %s120 = sphi 0, %s120
      %s122 = sphi 0, %s120
      %s123 = sphi 0, %s122
      %s137 = sphi 0, %s123
      %s141 = sphi 0, %s141
      %s143 = sphi 0, %s141
      %s144 = sphi 0, %s143
      %s158 = sphi 0, %s144
      %s162 = sphi 0, %s162
      %s164 = sphi 0, %s162
      %s165 = sphi 0, %s164
      %s179 = sphi 0, %s165
      %s183 = sphi 0, %s183
      %s185 = sphi 0, %s183
      %s186 = sphi 0, %s185
      %s200 = sphi 0, %s186
      %s204 = sphi 0, %s204
      %s206 = sphi 0, %s204
      %s207 = sphi 0, %s206
      %s221 = sphi 0, %s207
      %s227 = sphi 0, %s229
      %s230 = sphi 0, %s227
      %s231 = sphi 0, %s230
      %s247 = sphi 0, %s231
    $region4: #{tpu_custom_call.1} parent=1 // loop_header_branch
      %26 = sbr.rel (%p24) target = $region8
    $region5: #{tpu_custom_call.1} parent=1 // loop_body
      %s28 = ssub.s32 %s23, 1
      %s29 = ssub.s32 %s23, 2
      %s30 = sadd.s32 %s23, 1
      %s31 = ssub.s32 %s23, %s30
      %p32 = scmp.eq.s32.totalorder %s31, 0
      %s34 = sadd.s32 %s33, 1
      %s35 = scalar_select %p32, %s33, %s34
      %p38 = pneg %p32
      %p39 = scmp.eq.s32.totalorder %s23, 1
      %p40 = por %p38, %p39
      %p41 = scmp.ne.s32.totalorder %s33, %s36
      %p42 = scmp.eq.s32.totalorder %s23, 0
      %p43 = por %p41, %p42
      %p44 = scmp.ne.s32.totalorder %s33, %s36
      %p45 = scmp.eq.s32.totalorder %s28, 1
      %p46 = por %p44, %p45
      %p47 = scmp.ne.s32.totalorder %s36, %s37
      %p48 = scmp.eq.s32.totalorder %s28, 0
      %p49 = por %p47, %p48
      %p50 = scmp.ne.s32.totalorder %s36, %s37
      %p51 = scmp.eq.s32.totalorder %s29, 1
      %p52 = por %p50, %p51
      %p54 = scmp.ne.s32.totalorder %s37, %s53
      %p55 = scmp.eq.s32.totalorder %s29, 0
      %p56 = por %p54, %p55
      %s58 = sadd.s32 %s57, 1
      %p61 = scmp.eq.s32.totalorder %s23, 1
      %p62 = scmp.ne.s32.totalorder %s57, %s59
      %p63 = scmp.eq.s32.totalorder %s23, 0
      %p64 = por %p62, %p63
      %p65 = scmp.ne.s32.totalorder %s57, %s59
      %p66 = scmp.eq.s32.totalorder %s28, 1
      %p67 = por %p65, %p66
      %p68 = scmp.ne.s32.totalorder %s59, %s60
      %p69 = scmp.eq.s32.totalorder %s28, 0
      %p70 = por %p68, %p69
      %p71 = scmp.ne.s32.totalorder %s59, %s60
      %p72 = scmp.eq.s32.totalorder %s29, 1
      %p73 = por %p71, %p72
      %p75 = scmp.ne.s32.totalorder %s60, %s74
      %p76 = scmp.eq.s32.totalorder %s29, 0
      %p77 = por %p75, %p76
      %s79 = sadd.s32 %s78, 1
      %p82 = scmp.eq.s32.totalorder %s23, 1
      %p83 = scmp.ne.s32.totalorder %s78, %s80
      %p84 = scmp.eq.s32.totalorder %s23, 0
      %p85 = por %p83, %p84
      %p86 = scmp.ne.s32.totalorder %s78, %s80
      %p87 = scmp.eq.s32.totalorder %s28, 1
      %p88 = por %p86, %p87
      %p89 = scmp.ne.s32.totalorder %s80, %s81
      %p90 = scmp.eq.s32.totalorder %s28, 0
      %p91 = por %p89, %p90
      %p92 = scmp.ne.s32.totalorder %s80, %s81
      %p93 = scmp.eq.s32.totalorder %s29, 1
      %p94 = por %p92, %p93
      %p96 = scmp.ne.s32.totalorder %s81, %s95
      %p97 = scmp.eq.s32.totalorder %s29, 0
      %p98 = por %p96, %p97
      %s100 = sadd.s32 %s99, 1
      %p103 = scmp.eq.s32.totalorder %s23, 1
      %p104 = scmp.ne.s32.totalorder %s99, %s101
      %p105 = scmp.eq.s32.totalorder %s23, 0
      %p106 = por %p104, %p105
      %p107 = scmp.ne.s32.totalorder %s99, %s101
      %p108 = scmp.eq.s32.totalorder %s28, 1
      %p109 = por %p107, %p108
      %p110 = scmp.ne.s32.totalorder %s101, %s102
      %p111 = scmp.eq.s32.totalorder %s28, 0
      %p112 = por %p110, %p111
      %p113 = scmp.ne.s32.totalorder %s101, %s102
      %p114 = scmp.eq.s32.totalorder %s29, 1
      %p115 = por %p113, %p114
      %p117 = scmp.ne.s32.totalorder %s102, %s116
      %p118 = scmp.eq.s32.totalorder %s29, 0
      %p119 = por %p117, %p118
      %s121 = sadd.s32 %s120, 1
      %p124 = scmp.eq.s32.totalorder %s23, 1
      %p125 = scmp.ne.s32.totalorder %s120, %s122
      %p126 = scmp.eq.s32.totalorder %s23, 0
      %p127 = por %p125, %p126
      %p128 = scmp.ne.s32.totalorder %s120, %s122
      %p129 = scmp.eq.s32.totalorder %s28, 1
      %p130 = por %p128, %p129
      %p131 = scmp.ne.s32.totalorder %s122, %s123
      %p132 = scmp.eq.s32.totalorder %s28, 0
      %p133 = por %p131, %p132
      %p134 = scmp.ne.s32.totalorder %s122, %s123
      %p135 = scmp.eq.s32.totalorder %s29, 1
      %p136 = por %p134, %p135
      %p138 = scmp.ne.s32.totalorder %s123, %s137
      %p139 = scmp.eq.s32.totalorder %s29, 0
      %p140 = por %p138, %p139
      %s142 = sadd.s32 %s141, 1
      %p145 = scmp.eq.s32.totalorder %s23, 1
      %p146 = scmp.ne.s32.totalorder %s141, %s143
      %p147 = scmp.eq.s32.totalorder %s23, 0
      %p148 = por %p146, %p147
      %p149 = scmp.ne.s32.totalorder %s141, %s143
      %p150 = scmp.eq.s32.totalorder %s28, 1
      %p151 = por %p149, %p150
      %p152 = scmp.ne.s32.totalorder %s143, %s144
      %p153 = scmp.eq.s32.totalorder %s28, 0
      %p154 = por %p152, %p153
      %p155 = scmp.ne.s32.totalorder %s143, %s144
      %p156 = scmp.eq.s32.totalorder %s29, 1
      %p157 = por %p155, %p156
      %p159 = scmp.ne.s32.totalorder %s144, %s158
      %p160 = scmp.eq.s32.totalorder %s29, 0
      %p161 = por %p159, %p160
      %s163 = sadd.s32 %s162, 1
      %p166 = scmp.eq.s32.totalorder %s23, 1
      %p167 = scmp.ne.s32.totalorder %s162, %s164
      %p168 = scmp.eq.s32.totalorder %s23, 0
      %p169 = por %p167, %p168
      %p170 = scmp.ne.s32.totalorder %s162, %s164
      %p171 = scmp.eq.s32.totalorder %s28, 1
      %p172 = por %p170, %p171
      %p173 = scmp.ne.s32.totalorder %s164, %s165
      %p174 = scmp.eq.s32.totalorder %s28, 0
      %p175 = por %p173, %p174
      %p176 = scmp.ne.s32.totalorder %s164, %s165
      %p177 = scmp.eq.s32.totalorder %s29, 1
      %p178 = por %p176, %p177
      %p180 = scmp.ne.s32.totalorder %s165, %s179
      %p181 = scmp.eq.s32.totalorder %s29, 0
      %p182 = por %p180, %p181
      %s184 = sadd.s32 %s183, 1
      %p187 = scmp.eq.s32.totalorder %s23, 1
      %p188 = scmp.ne.s32.totalorder %s183, %s185
      %p189 = scmp.eq.s32.totalorder %s23, 0
      %p190 = por %p188, %p189
      %p191 = scmp.ne.s32.totalorder %s183, %s185
      %p192 = scmp.eq.s32.totalorder %s28, 1
      %p193 = por %p191, %p192
      %p194 = scmp.ne.s32.totalorder %s185, %s186
      %p195 = scmp.eq.s32.totalorder %s28, 0
      %p196 = por %p194, %p195
      %p197 = scmp.ne.s32.totalorder %s185, %s186
      %p198 = scmp.eq.s32.totalorder %s29, 1
      %p199 = por %p197, %p198
      %p201 = scmp.ne.s32.totalorder %s186, %s200
      %p202 = scmp.eq.s32.totalorder %s29, 0
      %p203 = por %p201, %p202
      %s205 = sadd.s32 %s204, 1
      %p208 = scmp.eq.s32.totalorder %s23, 1
      %p209 = scmp.ne.s32.totalorder %s204, %s206
      %p210 = scmp.eq.s32.totalorder %s23, 0
      %p211 = por %p209, %p210
      %p212 = scmp.ne.s32.totalorder %s204, %s206
      %p213 = scmp.eq.s32.totalorder %s28, 1
      %p214 = por %p212, %p213
      %p215 = scmp.ne.s32.totalorder %s206, %s207
      %p216 = scmp.eq.s32.totalorder %s28, 0
      %p217 = por %p215, %p216
      %p218 = scmp.ne.s32.totalorder %s206, %s207
      %p219 = scmp.eq.s32.totalorder %s29, 1
      %p220 = por %p218, %p219
      %p222 = scmp.ne.s32.totalorder %s207, %s221
      %p223 = scmp.eq.s32.totalorder %s29, 0
      %p224 = por %p222, %p223
      %s225 = ssub.s32 %s23, %s30
      %p226 = scmp.eq.s32.totalorder %s225, 0
      %s228 = sadd.s32 %s227, 1
      %s229 = scalar_select %p226, %s227, %s228
      %p232 = pneg %p226
      %p233 = scmp.eq.s32.totalorder %s23, 1
      %p234 = por %p232, %p233
      %p235 = scmp.ne.s32.totalorder %s227, %s230
      %p236 = scmp.eq.s32.totalorder %s23, 0
      %p237 = por %p235, %p236
      %p238 = scmp.ne.s32.totalorder %s227, %s230
      %p239 = scmp.eq.s32.totalorder %s28, 1
      %p240 = por %p238, %p239
      %p241 = scmp.ne.s32.totalorder %s230, %s231
      %p242 = scmp.eq.s32.totalorder %s28, 0
      %p243 = por %p241, %p242
      %p244 = scmp.ne.s32.totalorder %s230, %s231
      %p245 = scmp.eq.s32.totalorder %s29, 1
      %p246 = por %p244, %p245
      %p248 = scmp.ne.s32.totalorder %s231, %s247
      %p249 = scmp.eq.s32.totalorder %s29, 0
      %p250 = por %p248, %p249
      %p251 = scmp.le.s32.totalorder 1, %s23
      %p252 = scmp.lt.s32.totalorder %s23, 3
      %p253 = pnand %p251, %p252
      %p254 = pneg %p253
      // Predicated region
      $region9: #{tpu_custom_call.1} parent=5 // pred_check
        _
      $region10: #{tpu_custom_call.1} parent=5 // pred_check_branch
        %256 = sbr.rel (%p253) target = $region12
      $region11: #{tpu_custom_call.1} parent=5 // pred_region
        %s257 = ssub.s32 %s23, 1
        // Predicated region
        $region13: #{tpu_custom_call.1} parent=11 // pred_check
          %p258 = pneg %p70
        $region14: #{tpu_custom_call.1} parent=11 // pred_check_branch
          %260 = sbr.rel (%p258) target = $region16
        $region15: #{tpu_custom_call.1} parent=11 // pred_region
          %262 = vsyncadd [#allocation7], 0
          %s264 = sshll.u32 %s1, 4
          %s265 = int_to_ptr.hbm [resolvable:$true] %s264
          %s266 = sshll.u32 [#allocation6], 4
          %s267 = int_to_ptr.vmem [resolvable:$true] %s266
          %269 = dma.hbm_to_vmem [thread:$0]  %s265, 32, %s267, [#allocation7]
        $region16: #{tpu_custom_call.1} parent=11 // pred_fallthru
          _
        // Predicated region
        $region17: #{tpu_custom_call.1} parent=11 // pred_check
          %p270 = pneg %p91
        $region18: #{tpu_custom_call.1} parent=11 // pred_check_branch
          %272 = sbr.rel (%p270) target = $region20
        $region19: #{tpu_custom_call.1} parent=11 // pred_region
          _
        $region20: #{tpu_custom_call.1} parent=11 // pred_fallthru
          _
        // Predicated region
        $region21: #{tpu_custom_call.1} parent=11 // pred_check
          %p273 = pneg %p112
        $region22: #{tpu_custom_call.1} parent=11 // pred_check_branch
          %275 = sbr.rel (%p273) target = $region24
        $region23: #{tpu_custom_call.1} parent=11 // pred_region
          %277 = vsyncadd [#allocation7], 0
          %s278 = sshll.u32 %s3, 4
          %s279 = int_to_ptr.hbm [resolvable:$true] %s278
          %s280 = sshll.u32 [#allocation8], 4
          %s281 = int_to_ptr.vmem [resolvable:$true] %s280
          %286 = dma.hbm_to_vmem [thread:$0]  %s279, 1024, %s281, [#allocation7], 64, 64, 4
        $region24: #{tpu_custom_call.1} parent=11 // pred_fallthru
          _
        // Predicated region
        $region25: #{tpu_custom_call.1} parent=11 // pred_check
          %p287 = pneg %p133
        $region26: #{tpu_custom_call.1} parent=11 // pred_check_branch
          %289 = sbr.rel (%p287) target = $region28
        $region27: #{tpu_custom_call.1} parent=11 // pred_region
          _
        $region28: #{tpu_custom_call.1} parent=11 // pred_fallthru
          _
        // Predicated region
        $region29: #{tpu_custom_call.1} parent=11 // pred_check
          %p290 = pneg %p154
        $region30: #{tpu_custom_call.1} parent=11 // pred_check_branch
          %292 = sbr.rel (%p290) target = $region32
        $region31: #{tpu_custom_call.1} parent=11 // pred_region
          %294 = vsyncadd [#allocation10], 0
          %s295 = sshll.u32 %s5, 4
          %s296 = int_to_ptr.hbm [resolvable:$true] %s295
          %s297 = sshll.u32 [#allocation9], 4
          %s298 = int_to_ptr.vmem [resolvable:$true] %s297
          %303 = dma.hbm_to_vmem [thread:$0]  %s296, 512, %s298, [#allocation10], 128, 128, 8
        $region32: #{tpu_custom_call.1} parent=11 // pred_fallthru
          _
        // Predicated region
        $region33: #{tpu_custom_call.1} parent=11 // pred_check
          %p304 = pneg %p175
        $region34: #{tpu_custom_call.1} parent=11 // pred_check_branch
          %306 = sbr.rel (%p304) target = $region36
        $region35: #{tpu_custom_call.1} parent=11 // pred_region
          _
        $region36: #{tpu_custom_call.1} parent=11 // pred_fallthru
          _
        // Predicated region
        $region37: #{tpu_custom_call.1} parent=11 // pred_check
          %p307 = pneg %p196
        $region38: #{tpu_custom_call.1} parent=11 // pred_check_branch
          %309 = sbr.rel (%p307) target = $region40
        $region39: #{tpu_custom_call.1} parent=11 // pred_region
          %311 = vsyncadd [#allocation10], 0
          %s312 = sshll.u32 %s7, 4
          %s313 = int_to_ptr.hbm [resolvable:$true] %s312
          %s314 = sshll.u32 [#allocation11], 4
          %s315 = int_to_ptr.vmem [resolvable:$true] %s314
          %320 = dma.hbm_to_vmem [thread:$0]  %s313, 512, %s315, [#allocation10], 128, 128, 8
        $region40: #{tpu_custom_call.1} parent=11 // pred_fallthru
          _
        // Predicated region
        $region41: #{tpu_custom_call.1} parent=11 // pred_check
          %p321 = pneg %p217
        $region42: #{tpu_custom_call.1} parent=11 // pred_check_branch
          %323 = sbr.rel (%p321) target = $region44
        $region43: #{tpu_custom_call.1} parent=11 // pred_region
          _
        $region44: #{tpu_custom_call.1} parent=11 // pred_fallthru
          _
      $region12: #{tpu_custom_call.1} parent=5 // pred_fallthru
        _
      %p324 = scmp.lt.s32.totalorder %s23, 2
      // Predicated region
      $region45: #{tpu_custom_call.1} parent=5 // pred_check
        %p325 = pneg %p324
      $region46: #{tpu_custom_call.1} parent=5 // pred_check_branch
        %327 = sbr.rel (%p325) target = $region48
      $region47: #{tpu_custom_call.1} parent=5 // pred_region
        // Predicated region
        $region49: #{tpu_custom_call.1} parent=47 // pred_check
          %p328 = pneg %p43
        $region50: #{tpu_custom_call.1} parent=47 // pred_check_branch
          %330 = sbr.rel (%p328) target = $region52
        $region51: #{tpu_custom_call.1} parent=47 // pred_region
          %s331 = sand.u32 %s33, 1
          %s332 = scalar_lea.sflag [#allocation4], %s331
          %s333 = sand.u32 %s33, 1
          %s334 = smul.addr %s333, 8
          %s335 = scalar_lea.vmem [#allocation3], %s334
          %337 = vsyncadd %s332, 0
          %s338 = smul.addr %s23, 8
          %s339 = scalar_lea.hbm %s0, %s338
          %s341 = sshll.u32 %s339, 4
          %s342 = int_to_ptr.hbm [resolvable:$true] %s341
          %s343 = sshll.u32 %s335, 4
          %s344 = int_to_ptr.vmem [resolvable:$true] %s343
          %346 = dma.hbm_to_vmem [thread:$0]  %s342, 128, %s344, %s332
        $region52: #{tpu_custom_call.1} parent=47 // pred_fallthru
          _
      $region48: #{tpu_custom_call.1} parent=5 // pred_fallthru
        _
      %p347 = scmp.le.s32.totalorder 1, %s23
      %p348 = scmp.lt.s32.totalorder %s23, 3
      %p349 = pnand %p347, %p348
      %p350 = pneg %p349
      // Predicated region
      $region53: #{tpu_custom_call.1} parent=5 // pred_check
        _
      $region54: #{tpu_custom_call.1} parent=5 // pred_check_branch
        %352 = sbr.rel (%p349) target = $region56
      $region55: #{tpu_custom_call.1} parent=5 // pred_region
        %s353 = ssub.s32 %s23, 1
        %s354 = sand.u32 %s36, 1
        %s355 = scalar_lea.sflag [#allocation4], %s354
        %s356 = sand.u32 %s36, 1
        %s357 = smul.addr %s356, 8
        %s358 = scalar_lea.vmem [#allocation3], %s357
        // Predicated region
        $region57: #{tpu_custom_call.1} parent=55 // pred_check
          %p359 = pneg %p49
        $region58: #{tpu_custom_call.1} parent=55 // pred_check_branch
          %361 = sbr.rel (%p359) target = $region60
        $region59: #{tpu_custom_call.1} parent=55 // pred_region
          %363 = dma.done %s355, 128
        $region60: #{tpu_custom_call.1} parent=55 // pred_fallthru
          _
        // Predicated region
        $region61: #{tpu_custom_call.1} parent=55 // pred_check
          %p364 = pneg %p70
        $region62: #{tpu_custom_call.1} parent=55 // pred_check_branch
          %366 = sbr.rel (%p364) target = $region64
        $region63: #{tpu_custom_call.1} parent=55 // pred_region
          %368 = dma.done [#allocation7], 32
        $region64: #{tpu_custom_call.1} parent=55 // pred_fallthru
          _
        // Predicated region
        $region65: #{tpu_custom_call.1} parent=55 // pred_check
          %p369 = pneg %p112
        $region66: #{tpu_custom_call.1} parent=55 // pred_check_branch
          %371 = sbr.rel (%p369) target = $region68
        $region67: #{tpu_custom_call.1} parent=55 // pred_region
          %373 = dma.done [#allocation7], 1024
        $region68: #{tpu_custom_call.1} parent=55 // pred_fallthru
          _
        // Predicated region
        $region69: #{tpu_custom_call.1} parent=55 // pred_check
          %p374 = pneg %p154
        $region70: #{tpu_custom_call.1} parent=55 // pred_check_branch
          %376 = sbr.rel (%p374) target = $region72
        $region71: #{tpu_custom_call.1} parent=55 // pred_region
          %378 = dma.done [#allocation10], 512
        $region72: #{tpu_custom_call.1} parent=55 // pred_fallthru
          _
        // Predicated region
        $region73: #{tpu_custom_call.1} parent=55 // pred_check
          %p379 = pneg %p196
        $region74: #{tpu_custom_call.1} parent=55 // pred_check_branch
          %381 = sbr.rel (%p379) target = $region76
        $region75: #{tpu_custom_call.1} parent=55 // pred_region
          %383 = dma.done [#allocation10], 512
        $region76: #{tpu_custom_call.1} parent=55 // pred_fallthru
          _
        %s384 = sand.u32 %s36, 1
        %s385 = scalar_lea.sflag [#allocation4], %s384
        %s386 = sand.u32 %s36, 1
        %s387 = smul.addr %s386, 8
        %s388 = scalar_lea.vmem [#allocation3], %s387
        %p389 = pneg %p49
        %p390 = pneg %p46
        %p391 = pneg %p70
        %p392 = pneg %p67
        %p393 = pneg %p91
        %p394 = pneg %p88
        %p395 = pneg %p112
        %p396 = pneg %p109
        %p397 = pneg %p133
        %p398 = pneg %p130
        %p399 = pneg %p154
        %p400 = pneg %p151
        %p401 = pneg %p175
        %p402 = pneg %p172
        %p403 = pneg %p196
        %p404 = pneg %p193
        %p405 = pneg %p217
        %p406 = pneg %p214
        %p407 = pneg %p243
        %p408 = pneg %p240
        %s409 = sand.u32 %s230, 1
        %s410 = scalar_lea.sflag [#allocation5], %s409
        %s411 = sand.u32 %s230, 1
        %s412 = smul.addr %s411, 2
        %s413 = scalar_lea.vmem [#allocation12], %s412
        %p414 = scmp.eq.s32.totalorder %s28, 0
        // Predicated region
        $region77: #{tpu_custom_call.1} parent=55 // pred_check
          %p415 = pneg %p414
        $region78: #{tpu_custom_call.1} parent=55 // pred_check_branch
          %417 = sbr.rel (%p415) target = $region80
        $region79: #{tpu_custom_call.1} parent=55 // pred_region
          %v418 = vld [vmem:[#allocation6] sm:$0x3]
          %v419 = vtanh.pop %v418
          %420 = vst [vmem:[#allocation2] sm:$0x3] %v419
        $region80: #{tpu_custom_call.1} parent=55 // pred_fallthru
          _
        %v421 = vld [vmem:[%s358] sm:$0xff]
        %v422 = vld [vmem:[#allocation9] sm:$0xff]
        %v423 = vld [vmem:[#allocation9 + $0x8] sm:$0xff]
        %v424 = vld [vmem:[#allocation9 + $0x10] sm:$0xff]
        %v425 = vld [vmem:[#allocation9 + $0x18] sm:$0xff]
        %v426 = vld [vmem:[%s6] sm:$0x1]
        %v428 = vperm.slane %v426, 0
        %vm430 = vcmask 261120
        %v432 = vsel %vm430, %v421, 0
        %434 = vmatpush.msra.mxu0 0.0
        %435 = vmatpush.msra.mxu0 0.0
        %436 = vmatpush.msra.mxu0 0.0
        %437 = vmatpush.msra.mxu0 0.0
        %438 = vmatpush.msra.mxu0 0.0
        %439 = vmatpush.msra.mxu0 0.0
        %440 = vmatpush.msra.mxu0 0.0
        %441 = vmatpush.msra.mxu0 0.0
        %442 = vmatpush.msra.mxu0 0.0
        %443 = vmatpush.msra.mxu0 0.0
        %444 = vmatpush.msra.mxu0 0.0
        %445 = vmatpush.msra.mxu0 0.0
        %446 = vmatpush.msra.mxu0 %v425
        %447 = vmatpush.msra.mxu0 %v424
        %448 = vmatpush.msra.mxu0 %v423
        %449 = vmatpush.msra.mxu0 %v422
        %450 = vmatmul.f32.gmra.mxu0 %v432
        %v451 = vpop.f32.mrf.mxu0
        %v452 = vadd.f32 %v428, %v451
        %453 = vdwg.mxu0
        %v454 = vmax.f32 %v452, 0.0
        %v455 = vld [vmem:[#allocation11] sm:$0xff]
        %v456 = vld [vmem:[#allocation11 + $0x8] sm:$0xff]
        %v457 = vld [vmem:[#allocation11 + $0x10] sm:$0xff]
        %v458 = vld [vmem:[#allocation11 + $0x18] sm:$0xff]
        %v459 = vld [vmem:[%s8] sm:$0x1]
        %v461 = vperm.slane %v459, 0
        %v464 = vsel %vm430, %v454, 0
        %466 = vmatpush.msra.mxu0 0.0
        %467 = vmatpush.msra.mxu0 0.0
        %468 = vmatpush.msra.mxu0 0.0
        %469 = vmatpush.msra.mxu0 0.0
        %470 = vmatpush.msra.mxu0 0.0
        %471 = vmatpush.msra.mxu0 0.0
        %472 = vmatpush.msra.mxu0 0.0
        %473 = vmatpush.msra.mxu0 0.0
        %474 = vmatpush.msra.mxu0 0.0
        %475 = vmatpush.msra.mxu0 0.0
        %476 = vmatpush.msra.mxu0 0.0
        %477 = vmatpush.msra.mxu0 0.0
        %478 = vmatpush.msra.mxu0 %v458
        %479 = vmatpush.msra.mxu0 %v457
        %480 = vmatpush.msra.mxu0 %v456
        %481 = vmatpush.msra.mxu0 %v455
        %482 = vmatmul.f32.gmra.mxu0 %v464
        %v483 = vpop.f32.mrf.mxu0
        %v484 = vadd.f32 %v461, %v483
        %485 = vdwg.mxu0
        %v486 = vld [vmem:[%s2] sm:$0x1]
        %v487 = vld [vmem:[#allocation8] sm:$0xf]
        %v488 = vld [vmem:[#allocation8 + $0x4] sm:$0xf]
        %v489 = vld [vmem:[#allocation8 + $0x8] sm:$0xf]
        %v490 = vld [vmem:[#allocation8 + $0xc] sm:$0xf]
        %v491 = vld [vmem:[#allocation8 + $0x10] sm:$0xf]
        %v492 = vld [vmem:[#allocation8 + $0x14] sm:$0xf]
        %v493 = vld [vmem:[#allocation8 + $0x18] sm:$0xf]
        %v494 = vld [vmem:[#allocation8 + $0x1c] sm:$0xf]
        %v495 = vld [vmem:[#allocation8 + $0x20] sm:$0xf]
        %v496 = vld [vmem:[#allocation8 + $0x24] sm:$0xf]
        %v497 = vld [vmem:[#allocation8 + $0x28] sm:$0xf]
        %v498 = vld [vmem:[#allocation8 + $0x2c] sm:$0xf]
        %v499 = vld [vmem:[#allocation8 + $0x30] sm:$0xf]
        %v500 = vld [vmem:[#allocation8 + $0x34] sm:$0xf]
        %v501 = vld [vmem:[#allocation8 + $0x38] sm:$0xf]
        %v502 = vld [vmem:[#allocation8 + $0x3c] sm:$0xf]
        %v503 = vld [vmem:[%s4] sm:$0x1]
        %v504 = vlaneseq
        %v505 = vand.u32 %v504, 127
        %vm506 = vcmp.ge.s32.totalorder %v505, 96
        %v507 = vld [vmem:[#allocation2] sm:$0x3]
        %v509 = vperm.slane %v486, 0
        %v511 = vmul.f32 %v507, %v509
        %v512 = vpack.c.bf16 %v511, %v511
        %v514 = vperm.slane %v503, 0
        %v532 = vunpack.c.l.b16 %v487
        %v533 = vunpack.c.l.b16 %v488
        %v534 = vunpack.c.l.b16 %v489
        %v535 = vunpack.c.l.b16 %v490
        %v536 = vunpack.c.l.b16 %v491
        %v537 = vunpack.c.l.b16 %v492
        %v538 = vunpack.c.l.b16 %v493
        %v539 = vunpack.c.l.b16 %v494
        %v540 = vunpack.c.l.b16 %v495
        %v541 = vunpack.c.l.b16 %v496
        %v542 = vunpack.c.l.b16 %v497
        %v543 = vunpack.c.l.b16 %v498
        %v544 = vunpack.c.l.b16 %v499
        %v545 = vunpack.c.l.b16 %v500
        %v546 = vunpack.c.l.b16 %v501
        %v547 = vunpack.c.l.b16 %v502
        %v548 = vpack.c.b16 %v533, %v532
        %v549 = vpack.c.b16 %v535, %v534
        %v550 = vpack.c.b16 %v537, %v536
        %v551 = vpack.c.b16 %v539, %v538
        %v552 = vpack.c.b16 %v541, %v540
        %v553 = vpack.c.b16 %v543, %v542
        %v554 = vpack.c.b16 %v545, %v544
        %v555 = vpack.c.b16 %v547, %v546
        %564 = vmatpush.bf16.msra.mxu0 %v555
        %565 = vmatpush.bf16.msra.mxu0 %v554
        %566 = vmatpush.bf16.msra.mxu0 %v553
        %567 = vmatpush.bf16.msra.mxu0 %v552
        %568 = vmatpush.bf16.msra.mxu0 %v551
        %569 = vmatpush.bf16.msra.mxu0 %v550
        %570 = vmatpush.bf16.msra.mxu0 %v549
        %571 = vmatpush.bf16.msra.mxu0 %v548
        %572 = vmatmul.bf16.gmra.mxu0 %v512
        %v573 = vpop.f32.mrf.mxu0
        %v574 = vadd.f32 %v514, %v573
        %v575 = vpop.f32.mrf.mxu0
        %576 = vdwg.mxu0
        %v577 = vand.u32 2147483647, %v574
        %v578 = vmul.f32 %v577, 0.5
        %579 = vrot.lane.b32.xlu0 %v578, 32
        %v580 = vpop.permute.xlu0 %579
        %v581 = vmax.f32 %v578, %v580
        %582 = vrot.lane.b32.xlu0 %v581, 64
        %v583 = vpop.permute.xlu0 %582
        %v584 = vmax.f32 %v581, %v583
        %v585 = vsub.f32 %v578, %v584
        %v586 = vmul.f32 %v585, 1.442695
        %v587 = vpow.pop %v586
        %588 = vrot.lane.b32.xlu0 %v587, 32
        %v589 = vpop.permute.xlu0 %588
        %v590 = vadd.f32 %v587, %v589
        %591 = vrot.lane.b32.xlu0 %v590, 64
        %v592 = vpop.permute.xlu0 %591
        %v593 = vadd.f32 %v590, %v592
        %v594 = vmul.f32 %v511, %v587
        %595 = vrot.lane.b32.xlu0 %v594, 32
        %v596 = vpop.permute.xlu0 %595
        %v597 = vadd.f32 %v594, %v596
        %598 = vrot.lane.b32.xlu0 %v597, 64
        %v599 = vpop.permute.xlu0 %598
        %v600 = vadd.f32 %v597, %v599
        %v601 = vrcp.pop %v593
        %v602 = vmul.f32 %v593, %v601
        %v603 = vsub.f32 1.0, %v602
        %v604 = vmul.f32 %v601, %v603
        %v605 = vadd.f32 %v601, %v604
        %vm606 = vweird.f32 %v593
        %vm607 = vweird.f32 %v601
        %vm608 = vmor %vm606, %vm607
        %v609 = vsel %vm608, %v601, %v605
        %v610 = vand.u32 2147483647, %v593
        %vm611 = vcmp.eq.f32.partialorder %v610, 8.507059e+37
        %v612 = vand.u32 %v593, 2147483648
        %v613 = vor.u32 1.1754944e-38, %v612
        %v614 = vsel %vm611, %v613, %v609
        %v615 = vmul.f32 %v600, %v614
        %v616 = vadd.f32 %v484, %v615
        %v617 = vtanh.pop %v616
        %618 = vrot.lane.b32.xlu0 %v511, 96
        %v619 = vpop.permute.xlu0 %618
        %v620 = vsel %vm506, %v617, %v619
        %621 = vrot.lane.b32.xlu0 0.0, 96
        %v622 = vpop.permute.xlu0 %621
        %v623 = vsel %vm506, %v617, %v622
        %v624 = vmul.f32 %v620, %v509
        %v625 = vpack.c.bf16 %v624, %v624
        %626 = vmatpush.bf16.msra.mxu0 %v555
        %627 = vmatpush.bf16.msra.mxu0 %v554
        %628 = vmatpush.bf16.msra.mxu0 %v553
        %629 = vmatpush.bf16.msra.mxu0 %v552
        %630 = vmatpush.bf16.msra.mxu0 %v551
        %631 = vmatpush.bf16.msra.mxu0 %v550
        %632 = vmatpush.bf16.msra.mxu0 %v549
        %633 = vmatpush.bf16.msra.mxu0 %v548
        %634 = vmatmul.bf16.gmra.mxu0 %v625
        %v635 = vpop.f32.mrf.mxu0
        %v636 = vadd.f32 %v514, %v635
        %v637 = vpop.f32.mrf.mxu0
        %638 = vdwg.mxu0
        %v639 = vand.u32 2147483647, %v636
        %v640 = vmul.f32 %v639, 0.5
        %641 = vrot.lane.b32.xlu0 %v640, 32
        %v642 = vpop.permute.xlu0 %641
        %v643 = vmax.f32 %v640, %v642
        %644 = vrot.lane.b32.xlu0 %v643, 64
        %v645 = vpop.permute.xlu0 %644
        %v646 = vmax.f32 %v643, %v645
        %v647 = vsub.f32 %v640, %v646
        %v648 = vmul.f32 %v647, 1.442695
        %v649 = vpow.pop %v648
        %650 = vrot.lane.b32.xlu0 %v649, 32
        %v651 = vpop.permute.xlu0 %650
        %v652 = vadd.f32 %v649, %v651
        %653 = vrot.lane.b32.xlu0 %v652, 64
        %v654 = vpop.permute.xlu0 %653
        %v655 = vadd.f32 %v652, %v654
        %v656 = vmul.f32 %v624, %v649
        %657 = vrot.lane.b32.xlu0 %v656, 32
        %v658 = vpop.permute.xlu0 %657
        %v659 = vadd.f32 %v656, %v658
        %660 = vrot.lane.b32.xlu0 %v659, 64
        %v661 = vpop.permute.xlu0 %660
        %v662 = vadd.f32 %v659, %v661
        %v663 = vrcp.pop %v655
        %v664 = vmul.f32 %v655, %v663
        %v665 = vsub.f32 1.0, %v664
        %v666 = vmul.f32 %v663, %v665
        %v667 = vadd.f32 %v663, %v666
        %vm668 = vweird.f32 %v655
        %vm669 = vweird.f32 %v663
        %vm670 = vmor %vm668, %vm669
        %v671 = vsel %vm670, %v663, %v667
        %v672 = vand.u32 2147483647, %v655
        %vm673 = vcmp.eq.f32.partialorder %v672, 8.507059e+37
        %v674 = vand.u32 %v655, 2147483648
        %v675 = vor.u32 1.1754944e-38, %v674
        %v676 = vsel %vm673, %v675, %v671
        %v677 = vmul.f32 %v662, %v676
        %v679 = vrot.slane %v677, 6
        %v681 = vadd.f32 %v484, %v679
        %v682 = vtanh.pop %v681
        %683 = vrot.lane.b32.xlu0 %v624, 96
        %v684 = vpop.permute.xlu0 %683
        %v686 = vrot.slane %v684, 6
        %v688 = vsel %vm506, %v682, %v686
        %689 = vrot.lane.b32.xlu0 %v623, 96
        %v690 = vpop.permute.xlu0 %689
        %v692 = vrot.slane %v690, 6
        %v694 = vsel %vm506, %v682, %v692
        %v695 = vmul.f32 %v688, %v509
        %v696 = vpack.c.bf16 %v695, %v695
        %v698 = vrot.slane %v696, 1
        %700 = vmatpush.bf16.msra.mxu0 %v555
        %701 = vmatpush.bf16.msra.mxu0 %v554
        %702 = vmatpush.bf16.msra.mxu0 %v553
        %703 = vmatpush.bf16.msra.mxu0 %v552
        %704 = vmatpush.bf16.msra.mxu0 %v551
        %705 = vmatpush.bf16.msra.mxu0 %v550
        %706 = vmatpush.bf16.msra.mxu0 %v549
        %707 = vmatpush.bf16.msra.mxu0 %v548
        %708 = vmatmul.bf16.gmra.mxu0 %v698
        %v709 = vpop.f32.mrf.mxu0
        %v710 = vadd.f32 %v514, %v709
        %v711 = vpop.f32.mrf.mxu0
        %712 = vdwg.mxu0
        %v713 = vand.u32 2147483647, %v710
        %v714 = vmul.f32 %v713, 0.5
        %715 = vrot.lane.b32.xlu0 %v714, 32
        %v716 = vpop.permute.xlu0 %715
        %v717 = vmax.f32 %v714, %v716
        %718 = vrot.lane.b32.xlu0 %v717, 64
        %v719 = vpop.permute.xlu0 %718
        %v720 = vmax.f32 %v717, %v719
        %v721 = vsub.f32 %v714, %v720
        %v722 = vmul.f32 %v721, 1.442695
        %v723 = vpow.pop %v722
        %724 = vrot.lane.b32.xlu0 %v723, 32
        %v725 = vpop.permute.xlu0 %724
        %v726 = vadd.f32 %v723, %v725
        %727 = vrot.lane.b32.xlu0 %v726, 64
        %v728 = vpop.permute.xlu0 %727
        %v729 = vadd.f32 %v726, %v728
        %v731 = vrot.slane %v723, 6
        %v733 = vmul.f32 %v695, %v731
        %v735 = vrot.slane %v733, 2
        %737 = vrot.lane.b32.xlu0 %v735, 32
        %v738 = vpop.permute.xlu0 %737
        %v740 = vrot.slane %v738, 6
        %v742 = vadd.f32 %v733, %v740
        %v744 = vrot.slane %v742, 2
        %746 = vrot.lane.b32.xlu0 %v744, 64
        %v747 = vpop.permute.xlu0 %746
        %v749 = vrot.slane %v747, 6
        %v751 = vadd.f32 %v742, %v749
        %v753 = vrot.slane %v729, 6
        %v755 = vrcp.pop %v753
        %v756 = vmul.f32 %v753, %v755
        %v757 = vsub.f32 1.0, %v756
        %v758 = vmul.f32 %v755, %v757
        %v759 = vadd.f32 %v755, %v758
        %vm760 = vweird.f32 %v753
        %vm761 = vweird.f32 %v755
        %vm762 = vmor %vm760, %vm761
        %v763 = vsel %vm762, %v755, %v759
        %v764 = vand.u32 2147483647, %v753
        %vm765 = vcmp.eq.f32.partialorder %v764, 8.507059e+37
        %v766 = vand.u32 %v753, 2147483648
        %v767 = vor.u32 1.1754944e-38, %v766
        %v768 = vsel %vm765, %v767, %v763
        %v769 = vmul.f32 %v751, %v768
        %v771 = vrot.slane %v769, 6
        %v773 = vadd.f32 %v484, %v771
        %v774 = vtanh.pop %v773
        %v776 = vrot.slane %v695, 2
        %778 = vrot.lane.b32.xlu0 %v776, 96
        %v779 = vpop.permute.xlu0 %778
        %v781 = vrot.slane %v779, 4
        %v783 = vsel %vm506, %v774, %v781
        %v785 = vrot.slane %v694, 2
        %787 = vrot.lane.b32.xlu0 %v785, 96
        %v788 = vpop.permute.xlu0 %787
        %v790 = vrot.slane %v788, 4
        %v792 = vsel %vm506, %v774, %v790
        %v793 = vmul.f32 %v783, %v509
        %v794 = vpack.c.bf16 %v793, %v793
        %v796 = vrot.slane %v794, 2
        %798 = vmatpush.bf16.msra.mxu0 %v555
        %799 = vmatpush.bf16.msra.mxu0 %v554
        %800 = vmatpush.bf16.msra.mxu0 %v553
        %801 = vmatpush.bf16.msra.mxu0 %v552
        %802 = vmatpush.bf16.msra.mxu0 %v551
        %803 = vmatpush.bf16.msra.mxu0 %v550
        %804 = vmatpush.bf16.msra.mxu0 %v549
        %805 = vmatpush.bf16.msra.mxu0 %v548
        %806 = vmatmul.bf16.gmra.mxu0 %v796
        %v807 = vpop.f32.mrf.mxu0
        %v808 = vadd.f32 %v514, %v807
        %v809 = vpop.f32.mrf.mxu0
        %810 = vdwg.mxu0
        %v811 = vand.u32 2147483647, %v808
        %v812 = vmul.f32 %v811, 0.5
        %813 = vrot.lane.b32.xlu0 %v812, 32
        %v814 = vpop.permute.xlu0 %813
        %v815 = vmax.f32 %v812, %v814
        %816 = vrot.lane.b32.xlu0 %v815, 64
        %v817 = vpop.permute.xlu0 %816
        %v818 = vmax.f32 %v815, %v817
        %v819 = vsub.f32 %v812, %v818
        %v820 = vmul.f32 %v819, 1.442695
        %v821 = vpow.pop %v820
        %822 = vrot.lane.b32.xlu0 %v821, 32
        %v823 = vpop.permute.xlu0 %822
        %v824 = vadd.f32 %v821, %v823
        %825 = vrot.lane.b32.xlu0 %v824, 64
        %v826 = vpop.permute.xlu0 %825
        %v827 = vadd.f32 %v824, %v826
        %v829 = vrot.slane %v821, 4
        %v831 = vmul.f32 %v793, %v829
        %v833 = vrot.slane %v831, 4
        %835 = vrot.lane.b32.xlu0 %v833, 32
        %v836 = vpop.permute.xlu0 %835
        %v838 = vrot.slane %v836, 4
        %v840 = vadd.f32 %v831, %v838
        %v842 = vrot.slane %v840, 4
        %844 = vrot.lane.b32.xlu0 %v842, 64
        %v845 = vpop.permute.xlu0 %844
        %v847 = vrot.slane %v845, 4
        %v849 = vadd.f32 %v840, %v847
        %v851 = vrot.slane %v827, 4
        %v853 = vrcp.pop %v851
        %v854 = vmul.f32 %v851, %v853
        %v855 = vsub.f32 1.0, %v854
        %v856 = vmul.f32 %v853, %v855
        %v857 = vadd.f32 %v853, %v856
        %vm858 = vweird.f32 %v851
        %vm859 = vweird.f32 %v853
        %vm860 = vmor %vm858, %vm859
        %v861 = vsel %vm860, %v853, %v857
        %v862 = vand.u32 2147483647, %v851
        %vm863 = vcmp.eq.f32.partialorder %v862, 8.507059e+37
        %v864 = vand.u32 %v851, 2147483648
        %v865 = vor.u32 1.1754944e-38, %v864
        %v866 = vsel %vm863, %v865, %v861
        %v867 = vmul.f32 %v849, %v866
        %v869 = vrot.slane %v867, 6
        %v871 = vadd.f32 %v484, %v869
        %v872 = vtanh.pop %v871
        %v874 = vrot.slane %v793, 4
        %876 = vrot.lane.b32.xlu0 %v874, 96
        %v877 = vpop.permute.xlu0 %876
        %v879 = vrot.slane %v877, 2
        %v881 = vsel %vm506, %v872, %v879
        %v883 = vrot.slane %v792, 4
        %885 = vrot.lane.b32.xlu0 %v883, 96
        %v886 = vpop.permute.xlu0 %885
        %v888 = vrot.slane %v886, 2
        %v890 = vsel %vm506, %v872, %v888
        %891 = vst [vmem:[%s413 - $0x6] sm:$0xc0] %v890
        %892 = vst [vmem:[#allocation2 - $0x6] sm:$0xc0] %v881
        %s893 = sand.u32 %s230, 1
        %s894 = scalar_lea.sflag [#allocation5], %s893
        %s895 = sand.u32 %s230, 1
        %s896 = smul.addr %s895, 2
        %s897 = scalar_lea.vmem [#allocation12], %s896
        // Predicated region
        $region81: #{tpu_custom_call.1} parent=55 // pred_check
          %p898 = pneg %p240
        $region82: #{tpu_custom_call.1} parent=55 // pred_check_branch
          %900 = sbr.rel (%p898) target = $region84
        $region83: #{tpu_custom_call.1} parent=55 // pred_region
          %902 = vsyncadd %s894, 0
          %s903 = smul.addr %s28, 2
          %s904 = scalar_lea.hbm %s9, %s903
          %s906 = sshll.u32 %s897, 4
          %s907 = int_to_ptr.vmem [resolvable:$true] %s906
          %s908 = sshll.u32 %s904, 4
          %s909 = int_to_ptr.hbm [resolvable:$true] %s908
          %911 = dma.vmem_to_hbm [thread:$0]  %s907, 32, %s909, %s894
        $region84: #{tpu_custom_call.1} parent=55 // pred_fallthru
          _
      $region56: #{tpu_custom_call.1} parent=5 // pred_fallthru
        _
      %p912 = scmp.le.s32.totalorder 2, %s23
      // Predicated region
      $region85: #{tpu_custom_call.1} parent=5 // pred_check
        %p913 = pneg %p912
      $region86: #{tpu_custom_call.1} parent=5 // pred_check_branch
        %915 = sbr.rel (%p913) target = $region88
      $region87: #{tpu_custom_call.1} parent=5 // pred_region
        %s916 = ssub.s32 %s23, 2
        // Predicated region
        $region89: #{tpu_custom_call.1} parent=87 // pred_check
          %p917 = pneg %p246
        $region90: #{tpu_custom_call.1} parent=87 // pred_check_branch
          %919 = sbr.rel (%p917) target = $region92
        $region91: #{tpu_custom_call.1} parent=87 // pred_region
          %s920 = sand.u32 %s231, 1
          %s921 = scalar_lea.sflag [#allocation5], %s920
          %s922 = sand.u32 %s231, 1
          %s923 = smul.addr %s922, 2
          %s924 = scalar_lea.vmem [#allocation12], %s923
          %926 = dma.done %s921, 32
        $region92: #{tpu_custom_call.1} parent=87 // pred_fallthru
          _
      $region88: #{tpu_custom_call.1} parent=5 // pred_fallthru
        _
    $region6: #{tpu_custom_call.1} parent=1 // loop_footer
      %s27 = sadd.s32 1, %s23
    $region7: #{tpu_custom_call.1} parent=1 // loop_footer_branch
      %22 = sbr.rel target = $region3
    $region8: #{tpu_custom_call.1} parent=1 // loop_exit
      _
    %927 = vsyncpa [#allocation4], 1
    %s928 = scalar_lea.sflag [#allocation4], 1
    %929 = vsyncpa %s928, 1
    %930 = vsyncpa [#allocation7], 1
    %931 = vsyncpa [#allocation10], 1
    %932 = vsyncpa [#allocation5], 1
    %s933 = scalar_lea.sflag [#allocation5], 1
    %934 = vsyncpa %s933, 1

</llo_original>
